<compile_context>
chip_gen: v7x
topology: tpu7x:2x2x1
jax: 0.10.0
libtpu: 0.0.40
codegen_flags: <defaults>
</compile_context>

<pallas_src>
import jax
import jax.numpy as jnp
from jax.experimental import pallas as pl
from jax.experimental.pallas import tpu as pltpu

MIN_VALUE = 2.6
MAX_VALUE = 6.9
ADD_CONST = -2.648787352965254

# Collapsed clamp bounds (validity asserted in model_forward).
L1_LO, L1_HI = MIN_VALUE, min(MAX_VALUE, 6.0)   # (+c) o clamp[min,max] o ReLU6
L2_LO, L2_HI = MIN_VALUE, MAX_VALUE             # clamp[min,max] o ReLU


def _fused_kernel(x_ref, p1_ref, p2_ref, o_ref):
    # x_ref : (CinP,  L)         rows: [x channels | ones row | zero pad]
    # p1_ref: (CmidP, CinP)      cols: [w1^T | b1+ADD_CONST | zero pad]
    # p2_ref: (CoutP, CmidP+1)   cols: [w2^T (padded) | b2]
    # o_ref : (CoutP, L)
    kp = p2_ref.shape[1] - 1                      # = CmidP (static)

    x = x_ref[...]                                # (CinP, L)
    p1 = p1_ref[...]                              # (CmidP, CinP)

    # ---- layer 1: one MXU matmul; bias folded in via the ones-row of x ----
    h = jnp.dot(p1, x, preferred_element_type=jnp.float32)      # (CmidP, L)
    h = jnp.clip(h, L1_LO, L1_HI)

    # ---- layer 2: one MXU matmul + lane-broadcast bias add ----
    p2 = p2_ref[...]                              # (CoutP, CmidP+1)
    out = jnp.dot(p2[:, :kp], h, preferred_element_type=jnp.float32)
    out = out + p2[:, kp:kp + 1]                  # bias, broadcast over lanes
    out = jnp.clip(out, L2_LO, L2_HI)

    o_ref[...] = out.astype(o_ref.dtype)


def _round_up(a, b):
    return ((a + b - 1) // b) * b


def model_forward(x_nchw, w1, b1, w2, b2):
    """x_nchw: (N, Cin, H, W) f32.  w1/w2 are the 1x1 ConvTranspose2d weights
    as (Cin, Cout) matrices (4-D (Cin, Cout, 1, 1) also accepted); b1/b2 are
    (Cout,).  Returns (N, Cout, H, W) f32 matching the PyTorch forward."""
    # The fused clamp collapse requires these (guards future constant changes).
    assert 0.0 <= MIN_VALUE <= 6.0 <= MAX_VALUE

    if w1.ndim == 4:
        w1 = w1.reshape(w1.shape[0], w1.shape[1])
    if w2.ndim == 4:
        w2 = w2.reshape(w2.shape[0], w2.shape[1])

    N, Cin, H, W = x_nchw.shape
    Cmid = w1.shape[1]
    Cout = w2.shape[1]
    HW = H * W
    L = N * HW

    # Padded (layout-aligned) sizes.
    Lp = _round_up(L, 128)                 # lane axis
    CinP = _round_up(Cin + 1, 8)           # +1 for the ones (bias) row
    CmidP = _round_up(Cmid, 8)
    CoutP = _round_up(Cout, 8)

    # ---- activations: (N,Cin,HW) -> (Cin, N*HW), append ones row, pad ----
    x2d = jnp.transpose(x_nchw.reshape(N, Cin, HW), (1, 0, 2)).reshape(Cin, L)
    x2d = x2d.astype(jnp.float32)
    x_aug = jnp.concatenate([x2d, jnp.ones((1, L), jnp.float32)], axis=0)
    x_aug = jnp.pad(x_aug, ((0, CinP - (Cin + 1)), (0, Lp - L)))

    # ---- layer-1 params: [w1^T | b1 + ADD_CONST], zero-padded ----
    w1t = jnp.transpose(w1).astype(jnp.float32)                    # (Cmid, Cin)
    b1c = (b1.astype(jnp.float32) + ADD_CONST).reshape(Cmid, 1)
    p1 = jnp.concatenate([w1t, b1c], axis=1)                       # (Cmid, Cin+1)
    p1 = jnp.pad(p1, ((0, CmidP - Cmid), (0, CinP - (Cin + 1))))   # (CmidP, CinP)

    # ---- layer-2 params: [w2^T (padded) | b2] ----
    w2t = jnp.pad(jnp.transpose(w2).astype(jnp.float32),
                  ((0, CoutP - Cout), (0, CmidP - Cmid)))          # (CoutP, CmidP)
    b2c = jnp.pad(b2.astype(jnp.float32).reshape(Cout, 1),
                  ((0, CoutP - Cout), (0, 0)))                     # (CoutP, 1)
    p2 = jnp.concatenate([w2t, b2c], axis=1)                       # (CoutP, CmidP+1)

    flops = 2 * CmidP * CinP * Lp + 2 * CoutP * CmidP * Lp + CoutP * Lp
    bytes_accessed = 4 * (CinP * Lp + CmidP * CinP
                          + CoutP * (CmidP + 1) + CoutP * Lp)

    out = pl.pallas_call(
        _fused_kernel,
        out_shape=jax.ShapeDtypeStruct((CoutP, Lp), jnp.float32),
        in_specs=[
            pl.BlockSpec(memory_space=pltpu.MemorySpace.VMEM),   # x_aug
            pl.BlockSpec(memory_space=pltpu.MemorySpace.VMEM),   # p1
            pl.BlockSpec(memory_space=pltpu.MemorySpace.VMEM),   # p2
        ],
        out_specs=pl.BlockSpec(memory_space=pltpu.MemorySpace.VMEM),
        cost_estimate=pl.CostEstimate(flops=flops,
                                      bytes_accessed=bytes_accessed,
                                      transcendentals=0),
    )(x_aug, p1, p2)

    out = out[:Cout, :L].reshape(Cout, N, HW)
    out = jnp.transpose(out, (1, 0, 2)).reshape(N, Cout, H, W)
    return out


def _reference(x_nchw, w1, b1, w2, b2):
    # Pure-JAX reference mirroring the PyTorch forward exactly.
    x = jnp.transpose(x_nchw, (0, 2, 3, 1))             # NHWC
    v1 = jnp.einsum("nhwc,cd->nhwd", x, w1) + b1
    v2 = v1 + ADD_CONST
    v3 = jnp.maximum(v2, MIN_VALUE)                     # clamp_min
    v4 = jnp.minimum(v3, MAX_VALUE)                     # clamp_max
    v5 = jnp.clip(v4, 0.0, 6.0)                         # ReLU6
    v6 = jnp.einsum("nhwc,cd->nhwd", v5, w2) + b2
    v7 = jnp.maximum(v6, MIN_VALUE)
    v8 = jnp.minimum(v7, MAX_VALUE)
    v9 = jnp.maximum(v8, 0.0)                           # ReLU
    return jnp.transpose(v9, (0, 3, 1, 2))


if __name__ == "__main__":
    key = jax.random.PRNGKey(0)
    k_x, k_w1, k_b1, k_w2, k_b2 = jax.random.split(key, 5)

    N, Cin, H, W = 2, 2, 16, 16
    Cmid, Cout = 10, 10

    x = jax.random.normal(k_x, (N, Cin, H, W), dtype=jnp.float32)

    # 1x1 ConvTranspose2d(2,10) / (10,10) weights as (Cin, Cout) matrices.
    w1 = jax.random.normal(k_w1, (Cin, Cmid), dtype=jnp.float32) * 0.5
    b1 = jax.random.normal(k_b1, (Cmid,), dtype=jnp.float32) * 0.1
    w2 = jax.random.normal(k_w2, (Cmid, Cout), dtype=jnp.float32) * 0.5
    b2 = jax.random.normal(k_b2, (Cout,), dtype=jnp.float32) * 0.1

    out = jax.block_until_ready(model_forward(x, w1, b1, w2, b2))
    ref = jax.block_until_ready(_reference(x, w1, b1, w2, b2))

    assert out.shape == (N, Cout, H, W)
    assert jnp.allclose(out, ref, atol=1e-5, rtol=1e-5)

    print("KERNEL_OK")
</pallas_src>

<mosaic_0001>
module attributes {stable_mosaic.version = 11 : i64} {
  func.func @_fused_kernel(%arg0: memref<8x512xf32, #tpu.memory_space<vmem>>, %arg1: memref<16x8xf32, #tpu.memory_space<vmem>>, %arg2: memref<16x17xf32, #tpu.memory_space<vmem>>, %arg3: memref<16x512xf32, #tpu.memory_space<vmem>>) attributes {dimension_semantics = [], scalar_prefetch = 0 : i64, scratch_operands = 0 : i64, tpu.core_type = #tpu.core_type<tc>} {
    %c0 = arith.constant 0 : index
    %c0_0 = arith.constant 0 : index
    %0 = vector.load %arg0[%c0, %c0_0] : memref<8x512xf32, #tpu.memory_space<vmem>>, vector<8x512xf32>
    %c0_1 = arith.constant 0 : index
    %c0_2 = arith.constant 0 : index
    %1 = vector.load %arg1[%c0_1, %c0_2] : memref<16x8xf32, #tpu.memory_space<vmem>>, vector<16x8xf32>
    %cst = arith.constant dense<0.000000e+00> : vector<16x512xf32>
    %2 = tpu.matmul %1, %0, %cst {dimension_numbers = #tpu.dot_dimension_numbers<[1], [0], [0], [1], [0, 0, 1, 1], [], []>} : vector<16x8xf32>, vector<8x512xf32>, vector<16x512xf32> -> vector<16x512xf32>
    %cst_3 = arith.constant 2.600000e+00 : f32
    %cst_4 = arith.constant 6.000000e+00 : f32
    %3 = vector.broadcast %cst_3 : f32 to vector<16x512xf32>
    %4 = arith.maximumf %3, %2 : vector<16x512xf32>
    %5 = vector.broadcast %cst_4 : f32 to vector<16x512xf32>
    %6 = arith.minimumf %5, %4 : vector<16x512xf32>
    %c0_5 = arith.constant 0 : index
    %c0_6 = arith.constant 0 : index
    %7 = vector.load %arg2[%c0_5, %c0_6] : memref<16x17xf32, #tpu.memory_space<vmem>>, vector<16x17xf32>
    %8 = vector.extract_strided_slice %7 {offsets = [0, 0], sizes = [16, 16], strides = [1, 1]} : vector<16x17xf32> to vector<16x16xf32>
    %cst_7 = arith.constant dense<0.000000e+00> : vector<16x512xf32>
    %9 = tpu.matmul %8, %6, %cst_7 {dimension_numbers = #tpu.dot_dimension_numbers<[1], [0], [0], [1], [0, 0, 1, 1], [], []>} : vector<16x16xf32>, vector<16x512xf32>, vector<16x512xf32> -> vector<16x512xf32>
    %10 = vector.extract_strided_slice %7 {offsets = [0, 16], sizes = [16, 1], strides = [1, 1]} : vector<16x17xf32> to vector<16x1xf32>
    %11 = vector.broadcast %10 : vector<16x1xf32> to vector<16x512xf32>
    %12 = arith.addf %9, %11 : vector<16x512xf32>
    %cst_8 = arith.constant 2.600000e+00 : f32
    %cst_9 = arith.constant 6.900000e+00 : f32
    %13 = vector.broadcast %cst_8 : f32 to vector<16x512xf32>
    %14 = arith.maximumf %13, %12 : vector<16x512xf32>
    %15 = vector.broadcast %cst_9 : f32 to vector<16x512xf32>
    %16 = arith.minimumf %15, %14 : vector<16x512xf32>
    %c0_10 = arith.constant 0 : index
    %c0_11 = arith.constant 0 : index
    %17 = vector.load %arg3[%c0_10, %c0_11] : memref<16x512xf32, #tpu.memory_space<vmem>>, vector<16x512xf32>
    tpu.vector_store %arg3[%c0_10, %c0_11], %16 {strides = array<i32>} : memref<16x512xf32, #tpu.memory_space<vmem>>, vector<16x512xf32>,
    return
  }
}

</mosaic_0001>

<llo_original>
// kernel: tpu_custom_call.1
$region0: #{tpu_custom_call.1}
  #allocation0 [shape = 'u32[]', space=smem, size = 0x4, offset = 0x4, fixed_abs, tag = 'smem constant byte address 0x4 - core index']
  #allocation1 [shape = 'u32[144,128]{1,0:T(1,128)}', space=vmem, size = 0x12000, scoped, tag = 'internal scratch']
  %s0 = inlined_call_operand.hbm [shape: f32[8,512], index: 0, kind: input, shape index: {}]
  %s1 = inlined_call_operand.vmem [shape: f32[16,8], index: 1, kind: input, shape index: {}]
  %s2 = inlined_call_operand.vmem [shape: f32[16,17], index: 2, kind: input, shape index: {}]
  %s3 = inlined_call_operand.hbm [shape: f32[16,512], index: 3, kind: output, shape index: {}]
  %s4 = sld [smem:[#allocation0]]
  $region26: #{tpu_custom_call.1} parent=0
    _
  %s6 = ssub.s32 1, %s4
  %s7 = scalar_select 0, %s6, %s4
  $region1: #{tpu_custom_call.1} parent=0
    #allocation2 [shape = 'u8[16384]{0}', space=vmem, size = 0x4000, scoped, tag = 'input window, operand 0, single buffered']
    #allocation3 [shape = 's32[1]{0}', space=sflag, size = 0x4, scoped, tag = 'scoped memory for tpu_custom_call.1']
    #allocation4 [shape = 's32[1]{0}', space=sflag, size = 0x4, scoped, tag = 'scoped memory for tpu_custom_call.1']
    #allocation5 [shape = 'u8[32768]{0}', space=vmem, size = 0x8000, scoped, tag = 'output window, operand 0, single buffered']
    %8 = vsyncpa [#allocation3], 0
    %9 = vsyncpa [#allocation4], 0
    // Predicated region
    $region2: #{tpu_custom_call.1} parent=1 // pred_check
      _
    $region3: #{tpu_custom_call.1} parent=1 // pred_check_branch
      %11 = sbr.rel (0) target = $region5
    $region4: #{tpu_custom_call.1} parent=1 // pred_region
      %s13 = ssub.s32 512, 512
      %14 = vsyncadd [#allocation3], %s13
      %s16 = sshll.u32 [#allocation2], 4
      %s17 = int_to_ptr.vmem [resolvable:$true] %s16
      %19 = dma.hbm_to_vmem [thread:$0]  %s0, 512, %s17, [#allocation3]
    $region5: #{tpu_custom_call.1} parent=1 // pred_fallthru
      _
    // Predicated region
    $region6: #{tpu_custom_call.1} parent=1 // pred_check
      _
    $region7: #{tpu_custom_call.1} parent=1 // pred_check_branch
      %21 = sbr.rel (0) target = $region9
    $region8: #{tpu_custom_call.1} parent=1 // pred_region
      _
    $region9: #{tpu_custom_call.1} parent=1 // pred_fallthru
      _
    // Predicated region
    $region10: #{tpu_custom_call.1} parent=1 // pred_check
      _
    $region11: #{tpu_custom_call.1} parent=1 // pred_check_branch
      %23 = sbr.rel (0) target = $region13
    $region12: #{tpu_custom_call.1} parent=1 // pred_region
      _
    $region13: #{tpu_custom_call.1} parent=1 // pred_fallthru
      _
    // Predicated region
    $region14: #{tpu_custom_call.1} parent=1 // pred_check
      _
    $region15: #{tpu_custom_call.1} parent=1 // pred_check_branch
      %25 = sbr.rel (0) target = $region17
    $region16: #{tpu_custom_call.1} parent=1 // pred_region
      %26 = dma.done [#allocation3], 512
    $region17: #{tpu_custom_call.1} parent=1 // pred_fallthru
      _
    %v27 = vld [vmem:[#allocation2] sm:$0xff]
    %v28 = vld [vmem:[#allocation2 + $0x8] sm:$0xff]
    %v29 = vld [vmem:[#allocation2 + $0x10] sm:$0xff]
    %v30 = vld [vmem:[#allocation2 + $0x18] sm:$0xff]
    %v31 = vld [vmem:[%s1] sm:$0xff]
    %v32 = vld [vmem:[%s1 + $0x8] sm:$0xff]
    %vm33 = vcmask 64512
    %v35 = vsel %vm33, %v31, 0
    %v38 = vsel %vm33, %v32, 0
    %40 = vmatprep.subr.mxu0 %v28
    %41 = vmatpush1.msra.mxu0 %v27
    %42 = vmatprep.subr.mxu0 0.0
    %43 = vmatpush1.msra.mxu0 0.0
    %44 = vmatprep.subr.mxu0 0.0
    %45 = vmatpush1.msra.mxu0 0.0
    %46 = vmatprep.subr.mxu0 0.0
    %47 = vmatpush1.msra.mxu0 0.0
    %48 = vmatprep.subr.mxu0 0.0
    %49 = vmatpush1.msra.mxu0 0.0
    %50 = vmatprep.subr.mxu0 0.0
    %51 = vmatpush1.msra.mxu0 0.0
    %52 = vmatprep.subr.mxu0 0.0
    %53 = vmatpush1.msra.mxu0 0.0
    %54 = vmatprep.subr.mxu0 0.0
    %55 = vmatpush1.msra.mxu0 0.0
    %56 = vmatprep.subr.mxu0 0.0
    %57 = vmatpush1.msra.mxu0 0.0
    %58 = vmatprep.subr.mxu0 0.0
    %59 = vmatpush1.msra.mxu0 0.0
    %60 = vmatprep.subr.mxu0 0.0
    %61 = vmatpush1.msra.mxu0 0.0
    %62 = vmatprep.subr.mxu0 0.0
    %63 = vmatpush1.msra.mxu0 0.0
    %64 = vmatprep.subr.mxu0 0.0
    %65 = vmatpush1.msra.mxu0 0.0
    %66 = vmatprep.subr.mxu0 0.0
    %67 = vmatpush1.msra.mxu0 0.0
    %68 = vmatprep.subr.mxu0 0.0
    %69 = vmatpush1.msra.mxu0 0.0
    %70 = vmatprep.subr.mxu0 0.0
    %71 = vmatpush1.msra.mxu0 0.0
    %72 = vmatprep.subr.mxu0 0.0
    %73 = vmatpush1.msra.mxu0 0.0
    %74 = vmatprep.subr.mxu0 0.0
    %75 = vmatpush1.msra.mxu0 0.0
    %76 = vmatprep.subr.mxu0 0.0
    %77 = vmatpush1.msra.mxu0 0.0
    %78 = vmatprep.subr.mxu0 0.0
    %79 = vmatpush1.msra.mxu0 0.0
    %80 = vmatprep.subr.mxu0 0.0
    %81 = vmatpush1.msra.mxu0 0.0
    %82 = vmatprep.subr.mxu0 0.0
    %83 = vmatpush1.msra.mxu0 0.0
    %84 = vmatprep.subr.mxu0 0.0
    %85 = vmatpush1.msra.mxu0 0.0
    %86 = vmatprep.subr.mxu0 0.0
    %87 = vmatpush1.msra.mxu0 0.0
    %88 = vmatprep.subr.mxu0 0.0
    %89 = vmatpush1.msra.mxu0 0.0
    %90 = vmatprep.subr.mxu0 0.0
    %91 = vmatpush1.msra.mxu0 0.0
    %92 = vmatprep.subr.mxu0 0.0
    %93 = vmatpush1.msra.mxu0 0.0
    %94 = vmatprep.subr.mxu0 0.0
    %95 = vmatpush1.msra.mxu0 0.0
    %96 = vmatprep.subr.mxu0 0.0
    %97 = vmatpush1.msra.mxu0 0.0
    %98 = vmatprep.subr.mxu0 0.0
    %99 = vmatpush1.msra.mxu0 0.0
    %100 = vmatprep.subr.mxu0 0.0
    %101 = vmatpush1.msra.mxu0 0.0
    %102 = vmatprep.subr.mxu0 0.0
    %103 = vmatpush1.msra.mxu0 0.0
    %104 = vmatprep.mubr.f32.mxu0 0.0
    %105 = vmatmul.mubr.f32.gmra.mrb[0].mxu0 %v35
    %v106 = vpop.f32.mrb[0].mxu0
    %v107 = vadd.f32 0.0, %v106
    %v108 = vpop.f32.mrb[0].mxu0
    %v109 = vadd.f32 0.0, %v108
    %110 = vmatprep.mubr.f32.mxu0 0.0
    %111 = vmatmul.mubr.f32.gmra.mrb[0].mxu0 %v38
    %v112 = vpop.f32.mrb[0].mxu0
    %v113 = vadd.f32 0.0, %v112
    %v114 = vpop.f32.mrb[0].mxu0
    %v115 = vadd.f32 0.0, %v114
    %116 = vdwg.mxu0
    %117 = vmatprep.subr.mxu0 %v30
    %118 = vmatpush1.msra.mxu0 %v29
    %119 = vmatprep.subr.mxu0 0.0
    %120 = vmatpush1.msra.mxu0 0.0
    %121 = vmatprep.subr.mxu0 0.0
    %122 = vmatpush1.msra.mxu0 0.0
    %123 = vmatprep.subr.mxu0 0.0
    %124 = vmatpush1.msra.mxu0 0.0
    %125 = vmatprep.subr.mxu0 0.0
    %126 = vmatpush1.msra.mxu0 0.0
    %127 = vmatprep.subr.mxu0 0.0
    %128 = vmatpush1.msra.mxu0 0.0
    %129 = vmatprep.subr.mxu0 0.0
    %130 = vmatpush1.msra.mxu0 0.0
    %131 = vmatprep.subr.mxu0 0.0
    %132 = vmatpush1.msra.mxu0 0.0
    %133 = vmatprep.subr.mxu0 0.0
    %134 = vmatpush1.msra.mxu0 0.0
    %135 = vmatprep.subr.mxu0 0.0
    %136 = vmatpush1.msra.mxu0 0.0
    %137 = vmatprep.subr.mxu0 0.0
    %138 = vmatpush1.msra.mxu0 0.0
    %139 = vmatprep.subr.mxu0 0.0
    %140 = vmatpush1.msra.mxu0 0.0
    %141 = vmatprep.subr.mxu0 0.0
    %142 = vmatpush1.msra.mxu0 0.0
    %143 = vmatprep.subr.mxu0 0.0
    %144 = vmatpush1.msra.mxu0 0.0
    %145 = vmatprep.subr.mxu0 0.0
    %146 = vmatpush1.msra.mxu0 0.0
    %147 = vmatprep.subr.mxu0 0.0
    %148 = vmatpush1.msra.mxu0 0.0
    %149 = vmatprep.subr.mxu0 0.0
    %150 = vmatpush1.msra.mxu0 0.0
    %151 = vmatprep.subr.mxu0 0.0
    %152 = vmatpush1.msra.mxu0 0.0
    %153 = vmatprep.subr.mxu0 0.0
    %154 = vmatpush1.msra.mxu0 0.0
    %155 = vmatprep.subr.mxu0 0.0
    %156 = vmatpush1.msra.mxu0 0.0
    %157 = vmatprep.subr.mxu0 0.0
    %158 = vmatpush1.msra.mxu0 0.0
    %159 = vmatprep.subr.mxu0 0.0
    %160 = vmatpush1.msra.mxu0 0.0
    %161 = vmatprep.subr.mxu0 0.0
    %162 = vmatpush1.msra.mxu0 0.0
    %163 = vmatprep.subr.mxu0 0.0
    %164 = vmatpush1.msra.mxu0 0.0
    %165 = vmatprep.subr.mxu0 0.0
    %166 = vmatpush1.msra.mxu0 0.0
    %167 = vmatprep.subr.mxu0 0.0
    %168 = vmatpush1.msra.mxu0 0.0
    %169 = vmatprep.subr.mxu0 0.0
    %170 = vmatpush1.msra.mxu0 0.0
    %171 = vmatprep.subr.mxu0 0.0
    %172 = vmatpush1.msra.mxu0 0.0
    %173 = vmatprep.subr.mxu0 0.0
    %174 = vmatpush1.msra.mxu0 0.0
    %175 = vmatprep.subr.mxu0 0.0
    %176 = vmatpush1.msra.mxu0 0.0
    %177 = vmatprep.subr.mxu0 0.0
    %178 = vmatpush1.msra.mxu0 0.0
    %179 = vmatprep.subr.mxu0 0.0
    %180 = vmatpush1.msra.mxu0 0.0
    %181 = vmatprep.mubr.f32.mxu0 0.0
    %182 = vmatmul.mubr.f32.gmra.mrb[0].mxu0 %v35
    %v183 = vpop.f32.mrb[0].mxu0
    %v184 = vadd.f32 0.0, %v183
    %v185 = vpop.f32.mrb[0].mxu0
    %v186 = vadd.f32 0.0, %v185
    %187 = vmatprep.mubr.f32.mxu0 0.0
    %188 = vmatmul.mubr.f32.gmra.mrb[0].mxu0 %v38
    %v189 = vpop.f32.mrb[0].mxu0
    %v190 = vadd.f32 0.0, %v189
    %v191 = vpop.f32.mrb[0].mxu0
    %v192 = vadd.f32 0.0, %v191
    %193 = vdwg.mxu0
    %v194 = vmax.f32 %v107, 2.6
    %v195 = vmax.f32 %v109, 2.6
    %v196 = vmax.f32 %v184, 2.6
    %v197 = vmax.f32 %v186, 2.6
    %v198 = vmax.f32 %v113, 2.6
    %v199 = vmax.f32 %v115, 2.6
    %v200 = vmax.f32 %v190, 2.6
    %v201 = vmax.f32 %v192, 2.6
    %v202 = vmin.f32 %v194, 6.0
    %v203 = vmin.f32 %v195, 6.0
    %v204 = vmin.f32 %v196, 6.0
    %v205 = vmin.f32 %v197, 6.0
    %v206 = vmin.f32 %v198, 6.0
    %v207 = vmin.f32 %v199, 6.0
    %v208 = vmin.f32 %v200, 6.0
    %v209 = vmin.f32 %v201, 6.0
    %v210 = vld [vmem:[%s2] sm:$0xff]
    %v211 = vld [vmem:[%s2 + $0x8] sm:$0xff]
    %213 = vset.pattern.permute.xlu0 16
    %214 = vperm.xlu0 %213, %v210
    %v215 = vpop.permute.xlu0 %214
    %218 = vset.pattern.permute.xlu0 16
    %219 = vperm.xlu0 %218, %v211
    %v220 = vpop.permute.xlu0 %219
    %vm222 = vcmask 130048
    %v223 = vsel %vm222, %v210, 0
    %v225 = vsel %vm222, %v211, 0
    %227 = vmatprep.subr.mxu0 %v203
    %228 = vmatpush1.msra.mxu0 %v202
    %229 = vmatprep.subr.mxu0 %v207
    %230 = vmatpush1.msra.mxu0 %v206
    %231 = vmatprep.subr.mxu0 0.0
    %232 = vmatpush1.msra.mxu0 0.0
    %233 = vmatprep.subr.mxu0 0.0
    %234 = vmatpush1.msra.mxu0 0.0
    %235 = vmatprep.subr.mxu0 0.0
    %236 = vmatpush1.msra.mxu0 0.0
    %237 = vmatprep.subr.mxu0 0.0
    %238 = vmatpush1.msra.mxu0 0.0
    %239 = vmatprep.subr.mxu0 0.0
    %240 = vmatpush1.msra.mxu0 0.0
    %241 = vmatprep.subr.mxu0 0.0
    %242 = vmatpush1.msra.mxu0 0.0
    %243 = vmatprep.subr.mxu0 0.0
    %244 = vmatpush1.msra.mxu0 0.0
    %245 = vmatprep.subr.mxu0 0.0
    %246 = vmatpush1.msra.mxu0 0.0
    %247 = vmatprep.subr.mxu0 0.0
    %248 = vmatpush1.msra.mxu0 0.0
    %249 = vmatprep.subr.mxu0 0.0
    %250 = vmatpush1.msra.mxu0 0.0
    %251 = vmatprep.subr.mxu0 0.0
    %252 = vmatpush1.msra.mxu0 0.0
    %253 = vmatprep.subr.mxu0 0.0
    %254 = vmatpush1.msra.mxu0 0.0
    %255 = vmatprep.subr.mxu0 0.0
    %256 = vmatpush1.msra.mxu0 0.0
    %257 = vmatprep.subr.mxu0 0.0
    %258 = vmatpush1.msra.mxu0 0.0
    %259 = vmatprep.subr.mxu0 0.0
    %260 = vmatpush1.msra.mxu0 0.0
    %261 = vmatprep.subr.mxu0 0.0
    %262 = vmatpush1.msra.mxu0 0.0
    %263 = vmatprep.subr.mxu0 0.0
    %264 = vmatpush1.msra.mxu0 0.0
    %265 = vmatprep.subr.mxu0 0.0
    %266 = vmatpush1.msra.mxu0 0.0
    %267 = vmatprep.subr.mxu0 0.0
    %268 = vmatpush1.msra.mxu0 0.0
    %269 = vmatprep.subr.mxu0 0.0
    %270 = vmatpush1.msra.mxu0 0.0
    %271 = vmatprep.subr.mxu0 0.0
    %272 = vmatpush1.msra.mxu0 0.0
    %273 = vmatprep.subr.mxu0 0.0
    %274 = vmatpush1.msra.mxu0 0.0
    %275 = vmatprep.subr.mxu0 0.0
    %276 = vmatpush1.msra.mxu0 0.0
    %277 = vmatprep.subr.mxu0 0.0
    %278 = vmatpush1.msra.mxu0 0.0
    %279 = vmatprep.subr.mxu0 0.0
    %280 = vmatpush1.msra.mxu0 0.0
    %281 = vmatprep.subr.mxu0 0.0
    %282 = vmatpush1.msra.mxu0 0.0
    %283 = vmatprep.subr.mxu0 0.0
    %284 = vmatpush1.msra.mxu0 0.0
    %285 = vmatprep.subr.mxu0 0.0
    %286 = vmatpush1.msra.mxu0 0.0
    %287 = vmatprep.subr.mxu0 0.0
    %288 = vmatpush1.msra.mxu0 0.0
    %289 = vmatprep.subr.mxu0 0.0
    %290 = vmatpush1.msra.mxu0 0.0
    %291 = vmatprep.mubr.f32.mxu0 0.0
    %292 = vmatmul.mubr.f32.gmra.mrb[0].mxu0 %v223
    %v293 = vpop.f32.mrb[0].mxu0
    %v294 = vadd.f32 %v215, %v293
    %v295 = vpop.f32.mrb[0].mxu0
    %v296 = vadd.f32 %v215, %v295
    %297 = vmatprep.mubr.f32.mxu0 0.0
    %298 = vmatmul.mubr.f32.gmra.mrb[0].mxu0 %v225
    %v299 = vpop.f32.mrb[0].mxu0
    %v300 = vadd.f32 %v220, %v299
    %v301 = vpop.f32.mrb[0].mxu0
    %v302 = vadd.f32 %v220, %v301
    %303 = vdwg.mxu0
    %304 = vmatprep.subr.mxu0 %v205
    %305 = vmatpush1.msra.mxu0 %v204
    %306 = vmatprep.subr.mxu0 %v209
    %307 = vmatpush1.msra.mxu0 %v208
    %308 = vmatprep.subr.mxu0 0.0
    %309 = vmatpush1.msra.mxu0 0.0
    %310 = vmatprep.subr.mxu0 0.0
    %311 = vmatpush1.msra.mxu0 0.0
    %312 = vmatprep.subr.mxu0 0.0
    %313 = vmatpush1.msra.mxu0 0.0
    %314 = vmatprep.subr.mxu0 0.0
    %315 = vmatpush1.msra.mxu0 0.0
    %316 = vmatprep.subr.mxu0 0.0
    %317 = vmatpush1.msra.mxu0 0.0
    %318 = vmatprep.subr.mxu0 0.0
    %319 = vmatpush1.msra.mxu0 0.0
    %320 = vmatprep.subr.mxu0 0.0
    %321 = vmatpush1.msra.mxu0 0.0
    %322 = vmatprep.subr.mxu0 0.0
    %323 = vmatpush1.msra.mxu0 0.0
    %324 = vmatprep.subr.mxu0 0.0
    %325 = vmatpush1.msra.mxu0 0.0
    %326 = vmatprep.subr.mxu0 0.0
    %327 = vmatpush1.msra.mxu0 0.0
    %328 = vmatprep.subr.mxu0 0.0
    %329 = vmatpush1.msra.mxu0 0.0
    %330 = vmatprep.subr.mxu0 0.0
    %331 = vmatpush1.msra.mxu0 0.0
    %332 = vmatprep.subr.mxu0 0.0
    %333 = vmatpush1.msra.mxu0 0.0
    %334 = vmatprep.subr.mxu0 0.0
    %335 = vmatpush1.msra.mxu0 0.0
    %336 = vmatprep.subr.mxu0 0.0
    %337 = vmatpush1.msra.mxu0 0.0
    %338 = vmatprep.subr.mxu0 0.0
    %339 = vmatpush1.msra.mxu0 0.0
    %340 = vmatprep.subr.mxu0 0.0
    %341 = vmatpush1.msra.mxu0 0.0
    %342 = vmatprep.subr.mxu0 0.0
    %343 = vmatpush1.msra.mxu0 0.0
    %344 = vmatprep.subr.mxu0 0.0
    %345 = vmatpush1.msra.mxu0 0.0
    %346 = vmatprep.subr.mxu0 0.0
    %347 = vmatpush1.msra.mxu0 0.0
    %348 = vmatprep.subr.mxu0 0.0
    %349 = vmatpush1.msra.mxu0 0.0
    %350 = vmatprep.subr.mxu0 0.0
    %351 = vmatpush1.msra.mxu0 0.0
    %352 = vmatprep.subr.mxu0 0.0
    %353 = vmatpush1.msra.mxu0 0.0
    %354 = vmatprep.subr.mxu0 0.0
    %355 = vmatpush1.msra.mxu0 0.0
    %356 = vmatprep.subr.mxu0 0.0
    %357 = vmatpush1.msra.mxu0 0.0
    %358 = vmatprep.subr.mxu0 0.0
    %359 = vmatpush1.msra.mxu0 0.0
    %360 = vmatprep.subr.mxu0 0.0
    %361 = vmatpush1.msra.mxu0 0.0
    %362 = vmatprep.subr.mxu0 0.0
    %363 = vmatpush1.msra.mxu0 0.0
    %364 = vmatprep.subr.mxu0 0.0
    %365 = vmatpush1.msra.mxu0 0.0
    %366 = vmatprep.subr.mxu0 0.0
    %367 = vmatpush1.msra.mxu0 0.0
    %368 = vmatprep.mubr.f32.mxu0 0.0
    %369 = vmatmul.mubr.f32.gmra.mrb[0].mxu0 %v223
    %v370 = vpop.f32.mrb[0].mxu0
    %v371 = vadd.f32 %v215, %v370
    %v372 = vpop.f32.mrb[0].mxu0
    %v373 = vadd.f32 %v215, %v372
    %374 = vmatprep.mubr.f32.mxu0 0.0
    %375 = vmatmul.mubr.f32.gmra.mrb[0].mxu0 %v225
    %v376 = vpop.f32.mrb[0].mxu0
    %v377 = vadd.f32 %v220, %v376
    %v378 = vpop.f32.mrb[0].mxu0
    %v379 = vadd.f32 %v220, %v378
    %380 = vdwg.mxu0
    %v381 = vmax.f32 %v294, 2.6
    %v382 = vmax.f32 %v296, 2.6
    %v383 = vmax.f32 %v371, 2.6
    %v384 = vmax.f32 %v373, 2.6
    %v385 = vmax.f32 %v300, 2.6
    %v386 = vmax.f32 %v302, 2.6
    %v387 = vmax.f32 %v377, 2.6
    %v388 = vmax.f32 %v379, 2.6
    %v389 = vmin.f32 %v381, 6.9
    %v390 = vmin.f32 %v382, 6.9
    %v391 = vmin.f32 %v383, 6.9
    %v392 = vmin.f32 %v384, 6.9
    %v393 = vmin.f32 %v385, 6.9
    %v394 = vmin.f32 %v386, 6.9
    %v395 = vmin.f32 %v387, 6.9
    %v396 = vmin.f32 %v388, 6.9
    %397 = vst [vmem:[#allocation5] sm:$0xff] %v389
    %398 = vst [vmem:[#allocation5 + $0x8] sm:$0xff] %v390
    %399 = vst [vmem:[#allocation5 + $0x10] sm:$0xff] %v391
    %400 = vst [vmem:[#allocation5 + $0x18] sm:$0xff] %v392
    %401 = vst [vmem:[#allocation5 + $0x20] sm:$0xff] %v393
    %402 = vst [vmem:[#allocation5 + $0x28] sm:$0xff] %v394
    %403 = vst [vmem:[#allocation5 + $0x30] sm:$0xff] %v395
    %404 = vst [vmem:[#allocation5 + $0x38] sm:$0xff] %v396
    // Predicated region
    $region18: #{tpu_custom_call.1} parent=1 // pred_check
      _
    $region19: #{tpu_custom_call.1} parent=1 // pred_check_branch
      %406 = sbr.rel (0) target = $region21
    $region20: #{tpu_custom_call.1} parent=1 // pred_region
      %s408 = ssub.s32 1024, 1024
      %409 = vsyncadd [#allocation4], %s408
      %s410 = sshll.u32 [#allocation5], 4
      %s411 = int_to_ptr.vmem [resolvable:$true] %s410
      %416 = dma.vmem_to_hbm [thread:$0]  %s411, 1024, %s3, [#allocation4], 512, 512, 32
    $region21: #{tpu_custom_call.1} parent=1 // pred_fallthru
      _
    // Predicated region
    $region22: #{tpu_custom_call.1} parent=1 // pred_check
      _
    $region23: #{tpu_custom_call.1} parent=1 // pred_check_branch
      %418 = sbr.rel (0) target = $region25
    $region24: #{tpu_custom_call.1} parent=1 // pred_region
      %419 = dma.done [#allocation4], 1024
    $region25: #{tpu_custom_call.1} parent=1 // pred_fallthru
      _
    %420 = vsyncpa [#allocation3], 1
    %421 = vsyncpa [#allocation4], 1

</llo_original>
